<compile_context>
chip_gen: v7x
topology: tpu7x:2x2x1
jax: 0.10.0
libtpu: 0.0.40
codegen_flags: <defaults>
</compile_context>

<pallas_src>
import math

import jax
import jax.numpy as jnp
from jax.experimental import pallas as pl
from jax.experimental.pallas import tpu as pltpu

NUM_HEADS = 2
LN_EPS = 1e-5
NEG_INF = -1e9

# Packed-input column indices (constants TXT_* in the original codebase).
TXT_WORD, TXT_LEMMA, TXT_POS, TXT_NER = 0, 1, 2, 3


# ----------------------------------------------------------------------------
# Pallas kernel: fused transformer-encoder layer for one tile of sequences
# ----------------------------------------------------------------------------
def _build_transformer_kernel(seq_per_block, seq_len, num_heads):
    SB, T, H = seq_per_block, seq_len, num_heads

    def kernel(lengths_ref,                                        # scalar prefetch (SMEM)
               x_ref, wqkv_ref, bqkv_ref, wo_ref, w1_ref, b1_ref, w2_ref, vp_ref,
               o_ref, ctx_ref):
        N, D = x_ref.shape                                         # N = SB * T rows
        Dh = D // H
        cdt = wqkv_ref.dtype                                       # MXU compute dtype (bf16)

        x = x_ref[...]                                             # f32; residual path stays f32
        vp = vp_ref[...]                                           # (6, D) packed small params
        bo, ln1g, ln1b, b2, ln2g, ln2b = (vp[i:i + 1, :] for i in range(6))

        # --- fused Q/K/V projection: one (N, D) x (D, 3D) bf16 matmul, f32 accumulate.
        #     The 1/sqrt(Dh) softmax scale is pre-folded into the Q columns / bq.
        qkv = jnp.dot(x.astype(cdt), wqkv_ref[...],
                      preferred_element_type=jnp.float32) + bqkv_ref[...]

        base = pl.program_id(0) * SB
        col = jax.lax.broadcasted_iota(jnp.int32, (1, T), 1)

        # --- per-sequence attention: (T, T) score matrices (no (SB*T)^2 blow-up);
        #     key-padding bias rebuilt in-kernel from prefetched lengths (f32 math).
        for s in range(SB):                                        # static loop, static slices
            r0 = s * T
            kbias = jnp.where(col < lengths_ref[base + s],
                              jnp.float32(0.0), jnp.float32(NEG_INF))       # (1, T)
            heads = []
            for h in range(H):                                     # static loop, static slices
                qh = qkv[r0:r0 + T, h * Dh:(h + 1) * Dh]
                kh = qkv[r0:r0 + T, D + h * Dh:D + (h + 1) * Dh]
                vh = qkv[r0:r0 + T, 2 * D + h * Dh:2 * D + (h + 1) * Dh]
                sc = jax.lax.dot_general(qh.astype(cdt), kh.astype(cdt),
                                         (((1,), (1,)), ((), ())),
                                         preferred_element_type=jnp.float32)
                sc = sc + kbias
                sc = sc - jnp.max(sc, axis=-1, keepdims=True)
                p = jnp.exp(sc)
                p = p * pl.reciprocal(jnp.sum(p, axis=-1, keepdims=True), approx=True)
                heads.append(jnp.dot(p.astype(cdt), vh.astype(cdt),
                                     preferred_element_type=jnp.float32))
            # lane-concat head outputs -> one wide output projection below.
            ctx_ref[r0:r0 + T, :] = jnp.concatenate(heads, axis=-1).astype(cdt)

        attn_out = jnp.dot(ctx_ref[...], wo_ref[...],
                           preferred_element_type=jnp.float32) + bo

        def layer_norm(y, g, b):
            # one-pass statistics: var = E[y^2] - E[y]^2 (halves the XLU reductions)
            mu = jnp.mean(y, axis=-1, keepdims=True)
            ms = jnp.mean(y * y, axis=-1, keepdims=True)
            return (y - mu) * jax.lax.rsqrt(ms - mu * mu + LN_EPS) * g + b

        h1 = layer_norm(x + attn_out, ln1g, ln1b)

        # --- feed-forward (ReLU), bf16 matmuls with f32 accumulation ---
        f = jnp.dot(h1.astype(cdt), w1_ref[...],
                    preferred_element_type=jnp.float32) + b1_ref[...]
        f = jnp.maximum(f, 0.0)
        f = jnp.dot(f.astype(cdt), w2_ref[...],
                    preferred_element_type=jnp.float32) + b2

        o_ref[...] = layer_norm(h1 + f, ln2g, ln2b).astype(o_ref.dtype)

    return kernel


def transformer_encoder_pallas(x, lengths, params, seq_per_block=None,
                               compute_dtype=jnp.bfloat16):
    """x: (B, T, D) f32 padded embeddings; lengths: (B,) int32 valid-token counts."""
    B, T, D = x.shape
    F = params["w1"].shape[-1]
    H = NUM_HEADS
    Dh = D // H

    if seq_per_block is None:
        # keep nb = Bp/SB >= 2 grid steps (shards across v7x's two TensorCores via the
        # "parallel" axis) while amortizing per-step overhead over several sequences.
        seq_per_block = max(1, min(8, B // 2))
    SB = seq_per_block
    pad = (-B) % SB
    if pad:
        x = jnp.concatenate([x, jnp.zeros((pad, T, D), x.dtype)], axis=0)
        lengths = jnp.concatenate([lengths,
                                   jnp.zeros((pad,), lengths.dtype)], axis=0)
    Bp = B + pad
    nb = Bp // SB
    N = SB * T

    # --- fuse / pack parameters: weights stored bf16 (halves weight DMA + VMEM),
    #     biases / LN params stay f32, softmax scale folded into Q columns. ---
    scale = 1.0 / math.sqrt(Dh)
    wqkv = jnp.concatenate([params["wq"] * scale, params["wk"], params["wv"]],
                           axis=1).astype(compute_dtype)                     # (D, 3D)
    bqkv = jnp.concatenate([params["bq"] * scale, params["bk"], params["bv"]],
                           axis=1).astype(jnp.float32)                       # (1, 3D)
    vp = jnp.concatenate([params["bo"], params["ln1g"], params["ln1b"],
                          params["b2"], params["ln2g"], params["ln2b"]],
                         axis=0).astype(jnp.float32)                         # (6, D)
    wo = params["wo"].astype(compute_dtype)
    w1 = params["w1"].astype(compute_dtype)
    b1 = params["b1"].astype(jnp.float32)
    w2 = params["w2"].astype(compute_dtype)

    x_flat = x.reshape(Bp * T, D)                                            # zero-copy
    lengths = lengths.astype(jnp.int32)

    def full_spec(shape):
        nd = len(shape)
        return pl.BlockSpec(shape, lambda i, lens, nd=nd: (0,) * nd)

    kernel = _build_transformer_kernel(SB, T, H)

    # TODO(synk): at production sizes (D ~ 512-1024, F = 4D) tile w1/w2 over F on an
    # extra "arbitrary" grid axis (FFN accumulator in scratch) and/or single-buffer the
    # weight BlockSpecs so the weights fit v7x's 64 MiB VMEM; at demo sizes (D=32) the
    # MXU/lanes are under-filled and plain XLA would match this kernel.
    out = pl.pallas_call(
        kernel,
        out_shape=jax.ShapeDtypeStruct((Bp * T, D), jnp.float32),
        grid_spec=pltpu.PrefetchScalarGridSpec(
            num_scalar_prefetch=1,                                  # lengths -> SMEM
            grid=(nb,),
            in_specs=[
                pl.BlockSpec((N, D), lambda i, lens: (i, 0)),       # activation tile
                full_spec((D, 3 * D)),                              # fused wq|wk|wv (bf16)
                full_spec((1, 3 * D)),                              # fused bq|bk|bv (f32)
                full_spec((D, D)),                                  # wo (bf16)
                full_spec((D, F)), full_spec((1, F)),               # w1 (bf16), b1 (f32)
                full_spec((F, D)),                                  # w2 (bf16)
                full_spec((6, D)),                                  # packed bo/ln1/b2/ln2
            ],
            out_specs=pl.BlockSpec((N, D), lambda i, lens: (i, 0)),
            scratch_shapes=[pltpu.VMEM((N, D), compute_dtype)],     # head-concat context
        ),
        compiler_params=pltpu.CompilerParams(
            dimension_semantics=("parallel",),
            vmem_limit_bytes=64 * 1024 * 1024),
    )(lengths, x_flat, wqkv, bqkv, wo, w1, b1, w2, vp)

    return out.reshape(Bp, T, D)[:B]


# ----------------------------------------------------------------------------
# Plain-JAX glue: embeddings / concat (dropout = identity in eval mode)
# ----------------------------------------------------------------------------
def embed_and_concat(tokens, embs):
    """tokens: (B, T, 4) int32 with columns [WORD, LEMMA, POS, NER]."""
    word = embs["word"][tokens[..., TXT_WORD]]
    lemma = embs["lemma"][tokens[..., TXT_LEMMA]]
    pos = embs["pos"][tokens[..., TXT_POS]]
    ner = embs["ner"][tokens[..., TXT_NER]]
    emb = jnp.concatenate([lemma, pos, ner], axis=-1)   # drop_emb is identity (eval)
    emb = jnp.concatenate([word, emb], axis=-1)
    return emb


# ----------------------------------------------------------------------------
# Pure-JAX f32 reference (for correctness check of the kernel math)
# ----------------------------------------------------------------------------
def transformer_layer_ref(x, mask, p):
    B, T, D = x.shape
    H, Dh = NUM_HEADS, D // NUM_HEADS

    def ln(y, g, b):
        mu = jnp.mean(y, axis=-1, keepdims=True)
        var = jnp.mean((y - mu) ** 2, axis=-1, keepdims=True)
        return (y - mu) * jax.lax.rsqrt(var + LN_EPS) * g + b

    q = x @ p["wq"] + p["bq"]
    k = x @ p["wk"] + p["bk"]
    v = x @ p["wv"] + p["bv"]
    q = q.reshape(B, T, H, Dh).transpose(0, 2, 1, 3)
    k = k.reshape(B, T, H, Dh).transpose(0, 2, 1, 3)
    v = v.reshape(B, T, H, Dh).transpose(0, 2, 1, 3)
    s = jnp.einsum("bhqd,bhkd->bhqk", q, k) / math.sqrt(Dh)
    s = s + (1.0 - mask[:, None, None, :]) * NEG_INF
    pr = jax.nn.softmax(s, axis=-1)
    attn = jnp.einsum("bhqk,bhkd->bhqd", pr, v).transpose(0, 2, 1, 3).reshape(B, T, D)
    attn = attn @ p["wo"] + p["bo"]
    h1 = ln(x + attn, p["ln1g"], p["ln1b"])
    f = jnp.maximum(h1 @ p["w1"] + p["b1"], 0.0) @ p["w2"] + p["b2"]
    return ln(h1 + f, p["ln2g"], p["ln2b"])


# ----------------------------------------------------------------------------
# main
# ----------------------------------------------------------------------------
if __name__ == "__main__":
    key = jax.random.PRNGKey(0)

    # Small shapes consistent with the module's forward.
    B, T = 2, 8
    word_dim, lemma_dim, pos_dim, ner_dim = 16, 8, 4, 4
    D = word_dim + lemma_dim + pos_dim + ner_dim      # transformer input dim = 32
    F = 64                                            # FFN hidden dim
    vocab = {"word": 50, "lemma": 40, "pos": 12, "ner": 8}

    keys = jax.random.split(key, 24)
    ki = iter(keys)

    def init(shape, scale=0.02):
        return (scale * jax.random.normal(next(ki), shape)).astype(jnp.float32)

    embs = {
        "word": init((vocab["word"], word_dim), 0.1),
        "lemma": init((vocab["lemma"], lemma_dim), 0.1),
        "pos": init((vocab["pos"], pos_dim), 0.1),
        "ner": init((vocab["ner"], ner_dim), 0.1),
    }
    params = {
        "wq": init((D, D)), "bq": init((1, D)),
        "wk": init((D, D)), "bk": init((1, D)),
        "wv": init((D, D)), "bv": init((1, D)),
        "wo": init((D, D)), "bo": init((1, D)),
        "ln1g": jnp.ones((1, D), jnp.float32), "ln1b": jnp.zeros((1, D), jnp.float32),
        "w1": init((D, F)), "b1": init((1, F)),
        "w2": init((F, D)), "b2": init((1, D)),
        "ln2g": jnp.ones((1, D), jnp.float32), "ln2b": jnp.zeros((1, D), jnp.float32),
    }

    # Padded token ids (B, T, 4) and per-sequence lengths (emulating the PackedSequence).
    tok_key = jax.random.split(next(ki), 4)
    tokens = jnp.stack(
        [jax.random.randint(tok_key[0], (B, T), 0, vocab["word"]),
         jax.random.randint(tok_key[1], (B, T), 0, vocab["lemma"]),
         jax.random.randint(tok_key[2], (B, T), 0, vocab["pos"]),
         jax.random.randint(tok_key[3], (B, T), 0, vocab["ner"])],
        axis=-1).astype(jnp.int32)
    lengths = jnp.array([8, 5], dtype=jnp.int32)
    mask = (jnp.arange(T)[None, :] < lengths[:, None]).astype(jnp.float32)  # (B, T)

    padded_emb = embed_and_concat(tokens, embs).astype(jnp.float32)         # (B, T, D)

    out = transformer_encoder_pallas(padded_emb, lengths, params)
    out = jax.block_until_ready(out)

    ref = transformer_layer_ref(padded_emb, mask, params)
    # bf16 MXU matmuls (f32 accumulate) introduce ~1e-3 level absolute error vs the
    # f32 reference; softmax/LN/residual math stays f32 inside the kernel.
    assert jnp.allclose(out, ref, rtol=1e-2, atol=1e-2), "kernel mismatch vs reference"

    # Re-packing the padded outputs (PackedSequence) is pure layout glue; the
    # valid rows are out[b, :lengths[b]] for each sequence b.
    print("KERNEL_OK")
</pallas_src>

<mosaic_0001>
module attributes {stable_mosaic.version = 11 : i64} {
  func.func @kernel(%arg0: i32, %arg1: memref<2xi32, #tpu.memory_space<smem>>, %arg2: memref<8x32xf32, #tpu.memory_space<vmem>>, %arg3: memref<32x96xbf16, #tpu.memory_space<vmem>>, %arg4: memref<1x96xf32, #tpu.memory_space<vmem>>, %arg5: memref<32x32xbf16, #tpu.memory_space<vmem>>, %arg6: memref<32x64xbf16, #tpu.memory_space<vmem>>, %arg7: memref<1x64xf32, #tpu.memory_space<vmem>>, %arg8: memref<64x32xbf16, #tpu.memory_space<vmem>>, %arg9: memref<6x32xf32, #tpu.memory_space<vmem>>, %arg10: memref<8x32xf32, #tpu.memory_space<vmem>>, %arg11: memref<8x32xbf16, #tpu.memory_space<vmem>>) attributes {dimension_semantics = [#tpu.dimension_semantics<parallel>], iteration_bounds = array<i64: 2>, scalar_prefetch = 1 : i64, scratch_operands = 1 : i64, tpu.core_type = #tpu.core_type<tc>, window_params = [{transform_indices = @transform_0, window_bounds = array<i64: 8, 32>}, {pipeline_mode = #tpu.pipeline_mode<synchronous>, transform_indices = @transform_1, window_bounds = array<i64: 32, 96>}, {pipeline_mode = #tpu.pipeline_mode<synchronous>, transform_indices = @transform_2, window_bounds = array<i64: 1, 96>}, {pipeline_mode = #tpu.pipeline_mode<synchronous>, transform_indices = @transform_3, window_bounds = array<i64: 32, 32>}, {pipeline_mode = #tpu.pipeline_mode<synchronous>, transform_indices = @transform_4, window_bounds = array<i64: 32, 64>}, {pipeline_mode = #tpu.pipeline_mode<synchronous>, transform_indices = @transform_5, window_bounds = array<i64: 1, 64>}, {pipeline_mode = #tpu.pipeline_mode<synchronous>, transform_indices = @transform_6, window_bounds = array<i64: 64, 32>}, {pipeline_mode = #tpu.pipeline_mode<synchronous>, transform_indices = @transform_7, window_bounds = array<i64: 6, 32>}, {transform_indices = @transform_8, window_bounds = array<i64: 8, 32>}]} {
    %c0 = arith.constant 0 : index
    %c0_0 = arith.constant 0 : index
    %0 = vector.load %arg2[%c0, %c0_0] : memref<8x32xf32, #tpu.memory_space<vmem>>, vector<8x32xf32>
    %c0_1 = arith.constant 0 : index
    %c0_2 = arith.constant 0 : index
    %1 = vector.load %arg9[%c0_1, %c0_2] : memref<6x32xf32, #tpu.memory_space<vmem>>, vector<6x32xf32>
    %2 = vector.extract_strided_slice %1 {offsets = [0, 0], sizes = [1, 32], strides = [1, 1]} : vector<6x32xf32> to vector<1x32xf32>
    %3 = vector.extract_strided_slice %1 {offsets = [1, 0], sizes = [1, 32], strides = [1, 1]} : vector<6x32xf32> to vector<1x32xf32>
    %4 = vector.extract_strided_slice %1 {offsets = [2, 0], sizes = [1, 32], strides = [1, 1]} : vector<6x32xf32> to vector<1x32xf32>
    %5 = vector.extract_strided_slice %1 {offsets = [3, 0], sizes = [1, 32], strides = [1, 1]} : vector<6x32xf32> to vector<1x32xf32>
    %6 = vector.extract_strided_slice %1 {offsets = [4, 0], sizes = [1, 32], strides = [1, 1]} : vector<6x32xf32> to vector<1x32xf32>
    %7 = vector.extract_strided_slice %1 {offsets = [5, 0], sizes = [1, 32], strides = [1, 1]} : vector<6x32xf32> to vector<1x32xf32>
    %8 = arith.truncf %0 : vector<8x32xf32> to vector<8x32xbf16>
    %c0_3 = arith.constant 0 : index
    %c0_4 = arith.constant 0 : index
    %9 = vector.load %arg3[%c0_3, %c0_4] : memref<32x96xbf16, #tpu.memory_space<vmem>>, vector<32x96xbf16>
    %cst = arith.constant dense<0.000000e+00> : vector<8x96xf32>
    %10 = tpu.matmul %8, %9, %cst {dimension_numbers = #tpu.dot_dimension_numbers<[1], [0], [0], [1], [0, 0, 1, 1], [], []>} : vector<8x32xbf16>, vector<32x96xbf16>, vector<8x96xf32> -> vector<8x96xf32>
    %c0_5 = arith.constant 0 : index
    %c0_6 = arith.constant 0 : index
    %11 = vector.load %arg4[%c0_5, %c0_6] : memref<1x96xf32, #tpu.memory_space<vmem>>, vector<1x96xf32>
    %12 = vector.broadcast %11 : vector<1x96xf32> to vector<8x96xf32>
    %13 = arith.addf %10, %12 : vector<8x96xf32>
    %c1_i32 = arith.constant 1 : i32
    %14 = arith.muli %arg0, %c1_i32 : i32
    %15 = tpu.iota {dimensions = array<i32: 1>} : vector<1x8xi32>
    %c0_i32 = arith.constant 0 : i32
    %16 = arith.addi %14, %c0_i32 : i32
    %17 = arith.index_cast %16 : i32 to index
    %18 = memref.load %arg1[%17] : memref<2xi32, #tpu.memory_space<smem>>
    %19 = vector.broadcast %18 : i32 to vector<1x8xi32>
    %20 = arith.cmpi slt, %15, %19 : vector<1x8xi32>
    %cst_7 = arith.constant 0.000000e+00 : f32
    %cst_8 = arith.constant -1.000000e+09 : f32
    %21 = vector.broadcast %cst_7 : f32 to vector<1x8xf32>
    %22 = vector.broadcast %cst_8 : f32 to vector<1x8xf32>
    %23 = arith.select %20, %21, %22 : vector<1x8xi1>, vector<1x8xf32>
    %24 = vector.extract_strided_slice %13 {offsets = [0, 0], sizes = [8, 16], strides = [1, 1]} : vector<8x96xf32> to vector<8x16xf32>
    %25 = vector.extract_strided_slice %13 {offsets = [0, 32], sizes = [8, 16], strides = [1, 1]} : vector<8x96xf32> to vector<8x16xf32>
    %26 = vector.extract_strided_slice %13 {offsets = [0, 64], sizes = [8, 16], strides = [1, 1]} : vector<8x96xf32> to vector<8x16xf32>
    %27 = arith.truncf %24 : vector<8x16xf32> to vector<8x16xbf16>
    %28 = arith.truncf %25 : vector<8x16xf32> to vector<8x16xbf16>
    %cst_9 = arith.constant dense<0.000000e+00> : vector<8x8xf32>
    %29 = tpu.matmul %27, %28, %cst_9 {dimension_numbers = #tpu.dot_dimension_numbers<[1], [1], [0], [0], [0, 0, 1, 0], [], []>} : vector<8x16xbf16>, vector<8x16xbf16>, vector<8x8xf32> -> vector<8x8xf32>
    %30 = vector.broadcast %23 : vector<1x8xf32> to vector<8x8xf32>
    %31 = arith.addf %29, %30 : vector<8x8xf32>
    %cst_10 = arith.constant dense<0xFF800000> : vector<8xf32>
    %32 = vector.multi_reduction <maximumf>, %31, %cst_10 [1] : vector<8x8xf32> to vector<8xf32>
    %33 = vector.shape_cast %32 : vector<8xf32> to vector<8x1xf32>
    %34 = vector.broadcast %33 : vector<8x1xf32> to vector<8x8xf32>
    %35 = arith.subf %31, %34 : vector<8x8xf32>
    %36 = math.exp %35 : vector<8x8xf32>
    %cst_11 = arith.constant dense<0.000000e+00> : vector<8xf32>
    %37 = vector.multi_reduction <add>, %36, %cst_11 [1] : vector<8x8xf32> to vector<8xf32>
    %38 = vector.shape_cast %37 : vector<8xf32> to vector<8x1xf32>
    %39 = tpu.reciprocal %38 {approx = true} : vector<8x1xf32> -> vector<8x1xf32>
    %40 = vector.broadcast %39 : vector<8x1xf32> to vector<8x8xf32>
    %41 = arith.mulf %36, %40 : vector<8x8xf32>
    %42 = arith.truncf %41 : vector<8x8xf32> to vector<8x8xbf16>
    %43 = arith.truncf %26 : vector<8x16xf32> to vector<8x16xbf16>
    %cst_12 = arith.constant dense<0.000000e+00> : vector<8x16xf32>
    %44 = tpu.matmul %42, %43, %cst_12 {dimension_numbers = #tpu.dot_dimension_numbers<[1], [0], [0], [1], [0, 0, 1, 1], [], []>} : vector<8x8xbf16>, vector<8x16xbf16>, vector<8x16xf32> -> vector<8x16xf32>
    %45 = vector.extract_strided_slice %13 {offsets = [0, 16], sizes = [8, 16], strides = [1, 1]} : vector<8x96xf32> to vector<8x16xf32>
    %46 = vector.extract_strided_slice %13 {offsets = [0, 48], sizes = [8, 16], strides = [1, 1]} : vector<8x96xf32> to vector<8x16xf32>
    %47 = vector.extract_strided_slice %13 {offsets = [0, 80], sizes = [8, 16], strides = [1, 1]} : vector<8x96xf32> to vector<8x16xf32>
    %48 = arith.truncf %45 : vector<8x16xf32> to vector<8x16xbf16>
    %49 = arith.truncf %46 : vector<8x16xf32> to vector<8x16xbf16>
    %cst_13 = arith.constant dense<0.000000e+00> : vector<8x8xf32>
    %50 = tpu.matmul %48, %49, %cst_13 {dimension_numbers = #tpu.dot_dimension_numbers<[1], [1], [0], [0], [0, 0, 1, 0], [], []>} : vector<8x16xbf16>, vector<8x16xbf16>, vector<8x8xf32> -> vector<8x8xf32>
    %51 = vector.broadcast %23 : vector<1x8xf32> to vector<8x8xf32>
    %52 = arith.addf %50, %51 : vector<8x8xf32>
    %cst_14 = arith.constant dense<0xFF800000> : vector<8xf32>
    %53 = vector.multi_reduction <maximumf>, %52, %cst_14 [1] : vector<8x8xf32> to vector<8xf32>
    %54 = vector.shape_cast %53 : vector<8xf32> to vector<8x1xf32>
    %55 = vector.broadcast %54 : vector<8x1xf32> to vector<8x8xf32>
    %56 = arith.subf %52, %55 : vector<8x8xf32>
    %57 = math.exp %56 : vector<8x8xf32>
    %cst_15 = arith.constant dense<0.000000e+00> : vector<8xf32>
    %58 = vector.multi_reduction <add>, %57, %cst_15 [1] : vector<8x8xf32> to vector<8xf32>
    %59 = vector.shape_cast %58 : vector<8xf32> to vector<8x1xf32>
    %60 = tpu.reciprocal %59 {approx = true} : vector<8x1xf32> -> vector<8x1xf32>
    %61 = vector.broadcast %60 : vector<8x1xf32> to vector<8x8xf32>
    %62 = arith.mulf %57, %61 : vector<8x8xf32>
    %63 = arith.truncf %62 : vector<8x8xf32> to vector<8x8xbf16>
    %64 = arith.truncf %47 : vector<8x16xf32> to vector<8x16xbf16>
    %cst_16 = arith.constant dense<0.000000e+00> : vector<8x16xf32>
    %65 = tpu.matmul %63, %64, %cst_16 {dimension_numbers = #tpu.dot_dimension_numbers<[1], [0], [0], [1], [0, 0, 1, 1], [], []>} : vector<8x8xbf16>, vector<8x16xbf16>, vector<8x16xf32> -> vector<8x16xf32>
    %66 = tpu.concatenate %44, %65 in 1 : vector<8x16xf32>, vector<8x16xf32> -> vector<8x32xf32>
    %67 = arith.truncf %66 : vector<8x32xf32> to vector<8x32xbf16>
    %c0_17 = arith.constant 0 : index
    %c0_18 = arith.constant 0 : index
    %68 = vector.load %arg11[%c0_17, %c0_18] : memref<8x32xbf16, #tpu.memory_space<vmem>>, vector<8x32xbf16>
    tpu.vector_store %arg11[%c0_17, %c0_18], %67 {strides = array<i32>} : memref<8x32xbf16, #tpu.memory_space<vmem>>, vector<8x32xbf16>,
    %c0_19 = arith.constant 0 : index
    %c0_20 = arith.constant 0 : index
    %69 = vector.load %arg11[%c0_19, %c0_20] : memref<8x32xbf16, #tpu.memory_space<vmem>>, vector<8x32xbf16>
    %c0_21 = arith.constant 0 : index
    %c0_22 = arith.constant 0 : index
    %70 = vector.load %arg5[%c0_21, %c0_22] : memref<32x32xbf16, #tpu.memory_space<vmem>>, vector<32x32xbf16>
    %cst_23 = arith.constant dense<0.000000e+00> : vector<8x32xf32>
    %71 = tpu.matmul %69, %70, %cst_23 {dimension_numbers = #tpu.dot_dimension_numbers<[1], [0], [0], [1], [0, 0, 1, 1], [], []>} : vector<8x32xbf16>, vector<32x32xbf16>, vector<8x32xf32> -> vector<8x32xf32>
    %72 = vector.broadcast %2 : vector<1x32xf32> to vector<8x32xf32>
    %73 = arith.addf %71, %72 : vector<8x32xf32>
    %74 = arith.addf %0, %73 : vector<8x32xf32>
    %cst_24 = arith.constant dense<0.000000e+00> : vector<8xf32>
    %75 = vector.multi_reduction <add>, %74, %cst_24 [1] : vector<8x32xf32> to vector<8xf32>
    %76 = vector.shape_cast %75 : vector<8xf32> to vector<8x1xf32>
    %cst_25 = arith.constant 3.200000e+01 : f32
    %77 = vector.broadcast %cst_25 : f32 to vector<8x1xf32>
    %78 = arith.divf %76, %77 : vector<8x1xf32>
    %79 = arith.mulf %74, %74 : vector<8x32xf32>
    %cst_26 = arith.constant dense<0.000000e+00> : vector<8xf32>
    %80 = vector.multi_reduction <add>, %79, %cst_26 [1] : vector<8x32xf32> to vector<8xf32>
    %81 = vector.shape_cast %80 : vector<8xf32> to vector<8x1xf32>
    %cst_27 = arith.constant 3.200000e+01 : f32
    %82 = vector.broadcast %cst_27 : f32 to vector<8x1xf32>
    %83 = arith.divf %81, %82 : vector<8x1xf32>
    %84 = vector.broadcast %78 : vector<8x1xf32> to vector<8x32xf32>
    %85 = arith.subf %74, %84 : vector<8x32xf32>
    %86 = arith.mulf %78, %78 : vector<8x1xf32>
    %87 = arith.subf %83, %86 : vector<8x1xf32>
    %cst_28 = arith.constant 9.99999974E-6 : f32
    %88 = vector.broadcast %cst_28 : f32 to vector<8x1xf32>
    %89 = arith.addf %87, %88 : vector<8x1xf32>
    %90 = math.rsqrt %89 : vector<8x1xf32>
    %91 = vector.broadcast %90 : vector<8x1xf32> to vector<8x32xf32>
    %92 = arith.mulf %85, %91 : vector<8x32xf32>
    %93 = vector.broadcast %3 : vector<1x32xf32> to vector<8x32xf32>
    %94 = arith.mulf %92, %93 : vector<8x32xf32>
    %95 = vector.broadcast %4 : vector<1x32xf32> to vector<8x32xf32>
    %96 = arith.addf %94, %95 : vector<8x32xf32>
    %97 = arith.truncf %96 : vector<8x32xf32> to vector<8x32xbf16>
    %c0_29 = arith.constant 0 : index
    %c0_30 = arith.constant 0 : index
    %98 = vector.load %arg6[%c0_29, %c0_30] : memref<32x64xbf16, #tpu.memory_space<vmem>>, vector<32x64xbf16>
    %cst_31 = arith.constant dense<0.000000e+00> : vector<8x64xf32>
    %99 = tpu.matmul %97, %98, %cst_31 {dimension_numbers = #tpu.dot_dimension_numbers<[1], [0], [0], [1], [0, 0, 1, 1], [], []>} : vector<8x32xbf16>, vector<32x64xbf16>, vector<8x64xf32> -> vector<8x64xf32>
    %c0_32 = arith.constant 0 : index
    %c0_33 = arith.constant 0 : index
    %100 = vector.load %arg7[%c0_32, %c0_33] : memref<1x64xf32, #tpu.memory_space<vmem>>, vector<1x64xf32>
    %101 = vector.broadcast %100 : vector<1x64xf32> to vector<8x64xf32>
    %102 = arith.addf %99, %101 : vector<8x64xf32>
    %cst_34 = arith.constant 0.000000e+00 : f32
    %103 = vector.broadcast %cst_34 : f32 to vector<8x64xf32>
    %104 = arith.maximumf %102, %103 : vector<8x64xf32>
    %105 = arith.truncf %104 : vector<8x64xf32> to vector<8x64xbf16>
    %c0_35 = arith.constant 0 : index
    %c0_36 = arith.constant 0 : index
    %106 = vector.load %arg8[%c0_35, %c0_36] : memref<64x32xbf16, #tpu.memory_space<vmem>>, vector<64x32xbf16>
    %cst_37 = arith.constant dense<0.000000e+00> : vector<8x32xf32>
    %107 = tpu.matmul %105, %106, %cst_37 {dimension_numbers = #tpu.dot_dimension_numbers<[1], [0], [0], [1], [0, 0, 1, 1], [], []>} : vector<8x64xbf16>, vector<64x32xbf16>, vector<8x32xf32> -> vector<8x32xf32>
    %108 = vector.broadcast %5 : vector<1x32xf32> to vector<8x32xf32>
    %109 = arith.addf %107, %108 : vector<8x32xf32>
    %110 = arith.addf %96, %109 : vector<8x32xf32>
    %cst_38 = arith.constant dense<0.000000e+00> : vector<8xf32>
    %111 = vector.multi_reduction <add>, %110, %cst_38 [1] : vector<8x32xf32> to vector<8xf32>
    %112 = vector.shape_cast %111 : vector<8xf32> to vector<8x1xf32>
    %cst_39 = arith.constant 3.200000e+01 : f32
    %113 = vector.broadcast %cst_39 : f32 to vector<8x1xf32>
    %114 = arith.divf %112, %113 : vector<8x1xf32>
    %115 = arith.mulf %110, %110 : vector<8x32xf32>
    %cst_40 = arith.constant dense<0.000000e+00> : vector<8xf32>
    %116 = vector.multi_reduction <add>, %115, %cst_40 [1] : vector<8x32xf32> to vector<8xf32>
    %117 = vector.shape_cast %116 : vector<8xf32> to vector<8x1xf32>
    %cst_41 = arith.constant 3.200000e+01 : f32
    %118 = vector.broadcast %cst_41 : f32 to vector<8x1xf32>
    %119 = arith.divf %117, %118 : vector<8x1xf32>
    %120 = vector.broadcast %114 : vector<8x1xf32> to vector<8x32xf32>
    %121 = arith.subf %110, %120 : vector<8x32xf32>
    %122 = arith.mulf %114, %114 : vector<8x1xf32>
    %123 = arith.subf %119, %122 : vector<8x1xf32>
    %cst_42 = arith.constant 9.99999974E-6 : f32
    %124 = vector.broadcast %cst_42 : f32 to vector<8x1xf32>
    %125 = arith.addf %123, %124 : vector<8x1xf32>
    %126 = math.rsqrt %125 : vector<8x1xf32>
    %127 = vector.broadcast %126 : vector<8x1xf32> to vector<8x32xf32>
    %128 = arith.mulf %121, %127 : vector<8x32xf32>
    %129 = vector.broadcast %6 : vector<1x32xf32> to vector<8x32xf32>
    %130 = arith.mulf %128, %129 : vector<8x32xf32>
    %131 = vector.broadcast %7 : vector<1x32xf32> to vector<8x32xf32>
    %132 = arith.addf %130, %131 : vector<8x32xf32>
    %c0_43 = arith.constant 0 : index
    %c0_44 = arith.constant 0 : index
    %133 = vector.load %arg10[%c0_43, %c0_44] : memref<8x32xf32, #tpu.memory_space<vmem>>, vector<8x32xf32>
    tpu.vector_store %arg10[%c0_43, %c0_44], %132 {strides = array<i32>} : memref<8x32xf32, #tpu.memory_space<vmem>>, vector<8x32xf32>,
    return
  }
  func.func @transform_0(%arg0: i32, %arg1: memref<2xi32, #tpu.memory_space<smem>>) -> (i32, i32) {
    %c0_i32 = arith.constant 0 : i32
    %c0_i32_0 = arith.constant 0 : i32
    return %arg0, %c0_i32 : i32, i32
  }
  func.func @transform_1(%arg0: i32, %arg1: memref<2xi32, #tpu.memory_space<smem>>) -> (i32, i32) {
    %c0_i32 = arith.constant 0 : i32
    %c0_i32_0 = arith.constant 0 : i32
    %c0_i32_1 = arith.constant 0 : i32
    return %c0_i32, %c0_i32_0 : i32, i32
  }
  func.func @transform_2(%arg0: i32, %arg1: memref<2xi32, #tpu.memory_space<smem>>) -> (i32, i32) {
    %c0_i32 = arith.constant 0 : i32
    %c0_i32_0 = arith.constant 0 : i32
    %c0_i32_1 = arith.constant 0 : i32
    return %c0_i32, %c0_i32_0 : i32, i32
  }
  func.func @transform_3(%arg0: i32, %arg1: memref<2xi32, #tpu.memory_space<smem>>) -> (i32, i32) {
    %c0_i32 = arith.constant 0 : i32
    %c0_i32_0 = arith.constant 0 : i32
    %c0_i32_1 = arith.constant 0 : i32
    return %c0_i32, %c0_i32_0 : i32, i32
  }
  func.func @transform_4(%arg0: i32, %arg1: memref<2xi32, #tpu.memory_space<smem>>) -> (i32, i32) {
    %c0_i32 = arith.constant 0 : i32
    %c0_i32_0 = arith.constant 0 : i32
    %c0_i32_1 = arith.constant 0 : i32
    return %c0_i32, %c0_i32_0 : i32, i32
  }
  func.func @transform_5(%arg0: i32, %arg1: memref<2xi32, #tpu.memory_space<smem>>) -> (i32, i32) {
    %c0_i32 = arith.constant 0 : i32
    %c0_i32_0 = arith.constant 0 : i32
    %c0_i32_1 = arith.constant 0 : i32
    return %c0_i32, %c0_i32_0 : i32, i32
  }
  func.func @transform_6(%arg0: i32, %arg1: memref<2xi32, #tpu.memory_space<smem>>) -> (i32, i32) {
    %c0_i32 = arith.constant 0 : i32
    %c0_i32_0 = arith.constant 0 : i32
    %c0_i32_1 = arith.constant 0 : i32
    return %c0_i32, %c0_i32_0 : i32, i32
  }
  func.func @transform_7(%arg0: i32, %arg1: memref<2xi32, #tpu.memory_space<smem>>) -> (i32, i32) {
    %c0_i32 = arith.constant 0 : i32
    %c0_i32_0 = arith.constant 0 : i32
    %c0_i32_1 = arith.constant 0 : i32
    return %c0_i32, %c0_i32_0 : i32, i32
  }
  func.func @transform_8(%arg0: i32, %arg1: memref<2xi32, #tpu.memory_space<smem>>) -> (i32, i32) {
    %c0_i32 = arith.constant 0 : i32
    %c0_i32_0 = arith.constant 0 : i32
    return %arg0, %c0_i32 : i32, i32
  }
}

</mosaic_0001>

<llo_original>
// kernel: tpu_custom_call.1
$region0: #{tpu_custom_call.1}
  #allocation0 [shape = 'u32[]', space=smem, size = 0x4, offset = 0x4, fixed_abs, tag = 'smem constant byte address 0x4 - core index']
  #allocation1 [shape = 'u32[144,128]{1,0:T(1,128)}', space=vmem, size = 0x12000, scoped, tag = 'internal scratch']
  #allocation2 [shape = 'bf16[8,32]{1,0:T(8,128)(2,1)}', space=vmem, size = 0x800, scoped, tag = 'scratch operand']
  #allocation3 [shape = 's32[1]{0}', space=sflag, size = 0x4, scoped, tag = 'scoped memory for tpu_custom_call.1']
  #allocation4 [shape = 'u8[512]{0}', space=smem, size = 0x200, scoped, tag = 'prefetched SMEM operand 0']
  %s0 = inlined_call_operand.hbm [shape: s32[2], index: 0, kind: input, shape index: {}]
  %s1 = inlined_call_operand.hbm [shape: f32[16,32], index: 1, kind: input, shape index: {}]
  %s2 = inlined_call_operand.hbm [shape: bf16[32,96], index: 2, kind: input, shape index: {}]
  %s3 = inlined_call_operand.hbm [shape: f32[1,96], index: 3, kind: input, shape index: {}]
  %s4 = inlined_call_operand.hbm [shape: bf16[32,32], index: 4, kind: input, shape index: {}]
  %s5 = inlined_call_operand.hbm [shape: bf16[32,64], index: 5, kind: input, shape index: {}]
  %s6 = inlined_call_operand.hbm [shape: f32[1,64], index: 6, kind: input, shape index: {}]
  %s7 = inlined_call_operand.hbm [shape: bf16[64,32], index: 7, kind: input, shape index: {}]
  %s8 = inlined_call_operand.hbm [shape: f32[6,32], index: 8, kind: input, shape index: {}]
  %s9 = inlined_call_operand.hbm [shape: f32[16,32], index: 9, kind: output, shape index: {}]
  %s10 = sld [smem:[#allocation0]]
  $region97: #{tpu_custom_call.1} parent=0
    _
  %s12 = ssub.s32 1, %s10
  %s13 = scalar_select 0, %s12, %s10
  %15 = dma.hbm_to_smem %s0, 16, [#allocation4], [#allocation3]
  %16 = dma.done [#allocation3], 16
  %17 = sfence
  $region1: #{tpu_custom_call.1} parent=0
    #allocation5 [shape = 'u8[8192]{0}', space=vmem, size = 0x2000, scoped, tag = 'input window, operand 1']
    #allocation6 [shape = 's32[2]{0}', space=sflag, size = 0x8, scoped, tag = 'scoped memory for tpu_custom_call.1']
    #allocation7 [shape = 's32[2]{0}', space=sflag, size = 0x8, scoped, tag = 'scoped memory for tpu_custom_call.1']
    #allocation8 [shape = 'u8[8192]{0}', space=vmem, size = 0x2000, scoped, tag = 'input window, operand 2, single buffered']
    #allocation9 [shape = 's32[1]{0}', space=sflag, size = 0x4, scoped, tag = 'scoped memory for tpu_custom_call.1']
    #allocation10 [shape = 'u8[512]{0}', space=vmem, size = 0x400, scoped, tag = 'input window, operand 3, single buffered']
    #allocation11 [shape = 'u8[8192]{0}', space=vmem, size = 0x2000, scoped, tag = 'input window, operand 4, single buffered']
    #allocation12 [shape = 's32[1]{0}', space=sflag, size = 0x4, scoped, tag = 'scoped memory for tpu_custom_call.1']
    #allocation13 [shape = 'u8[8192]{0}', space=vmem, size = 0x2000, scoped, tag = 'input window, operand 5, single buffered']
    #allocation14 [shape = 'u8[512]{0}', space=vmem, size = 0x400, scoped, tag = 'input window, operand 6, single buffered']
    #allocation15 [shape = 's32[1]{0}', space=sflag, size = 0x4, scoped, tag = 'scoped memory for tpu_custom_call.1']
    #allocation16 [shape = 'u8[16384]{0}', space=vmem, size = 0x4000, scoped, tag = 'input window, operand 7, single buffered']
    #allocation17 [shape = 'u8[4096]{0}', space=vmem, size = 0x1000, scoped, tag = 'input window, operand 8, single buffered']
    #allocation18 [shape = 's32[1]{0}', space=sflag, size = 0x4, scoped, tag = 'scoped memory for tpu_custom_call.1']
    #allocation19 [shape = 'u8[8192]{0}', space=vmem, size = 0x2000, scoped, tag = 'output window, operand 0']
    %18 = vsyncpa [#allocation6], 0
    %s19 = scalar_lea.sflag [#allocation6], 1
    %20 = vsyncpa %s19, 0
    %21 = vsyncpa [#allocation9], 0
    %22 = vsyncpa [#allocation12], 0
    %23 = vsyncpa [#allocation15], 0
    %24 = vsyncpa [#allocation18], 0
    %25 = vsyncpa [#allocation7], 0
    %s26 = scalar_lea.sflag [#allocation7], 1
    %27 = vsyncpa %s26, 0
    loop: start=0, step=1, limit=4
    $region2: #{tpu_custom_call.1} parent=1 // loop_pre_header
      _
    $region3: #{tpu_custom_call.1} parent=1 // loop_header
      %s29 = sphi 0, %s33
      %p30 = scmp.ge.s32.totalorder %s29, 4
      %s39 = sphi 0, %s41
      %s42 = sphi 0, %s39
      %s43 = sphi 0, %s42
      %s59 = sphi 0, %s43
      %s63 = sphi 0, %s63
      %s65 = sphi 0, %s63
      %s66 = sphi 0, %s65
      %s80 = sphi 0, %s66
      %s84 = sphi 0, %s84
      %s86 = sphi 0, %s84
      %s87 = sphi 0, %s86
      %s101 = sphi 0, %s87
      %s105 = sphi 0, %s105
      %s107 = sphi 0, %s105
      %s108 = sphi 0, %s107
      %s122 = sphi 0, %s108
      %s126 = sphi 0, %s126
      %s128 = sphi 0, %s126
      %s129 = sphi 0, %s128
      %s143 = sphi 0, %s129
      %s147 = sphi 0, %s147
      %s149 = sphi 0, %s147
      %s150 = sphi 0, %s149
      %s164 = sphi 0, %s150
      %s168 = sphi 0, %s168
      %s170 = sphi 0, %s168
      %s171 = sphi 0, %s170
      %s185 = sphi 0, %s171
      %s189 = sphi 0, %s189
      %s191 = sphi 0, %s189
      %s192 = sphi 0, %s191
      %s206 = sphi 0, %s192
      %s212 = sphi 0, %s214
      %s215 = sphi 0, %s212
      %s216 = sphi 0, %s215
      %s232 = sphi 0, %s216
    $region4: #{tpu_custom_call.1} parent=1 // loop_header_branch
      %32 = sbr.rel (%p30) target = $region8
    $region5: #{tpu_custom_call.1} parent=1 // loop_body
      %s34 = ssub.s32 %s29, 1
      %s35 = ssub.s32 %s29, 2
      %s36 = sadd.s32 %s29, 1
      %s37 = ssub.s32 %s29, %s36
      %p38 = scmp.eq.s32.totalorder %s37, 0
      %s40 = sadd.s32 %s39, 1
      %s41 = scalar_select %p38, %s39, %s40
      %p44 = pneg %p38
      %p45 = scmp.eq.s32.totalorder %s29, 1
      %p46 = por %p44, %p45
      %p47 = scmp.ne.s32.totalorder %s39, %s42
      %p48 = scmp.eq.s32.totalorder %s29, 0
      %p49 = por %p47, %p48
      %p50 = scmp.ne.s32.totalorder %s39, %s42
      %p51 = scmp.eq.s32.totalorder %s34, 1
      %p52 = por %p50, %p51
      %p53 = scmp.ne.s32.totalorder %s42, %s43
      %p54 = scmp.eq.s32.totalorder %s34, 0
      %p55 = por %p53, %p54
      %p56 = scmp.ne.s32.totalorder %s42, %s43
      %p57 = scmp.eq.s32.totalorder %s35, 1
      %p58 = por %p56, %p57
      %p60 = scmp.ne.s32.totalorder %s43, %s59
      %p61 = scmp.eq.s32.totalorder %s35, 0
      %p62 = por %p60, %p61
      %s64 = sadd.s32 %s63, 1
      %p67 = scmp.eq.s32.totalorder %s29, 1
      %p68 = scmp.ne.s32.totalorder %s63, %s65
      %p69 = scmp.eq.s32.totalorder %s29, 0
      %p70 = por %p68, %p69
      %p71 = scmp.ne.s32.totalorder %s63, %s65
      %p72 = scmp.eq.s32.totalorder %s34, 1
      %p73 = por %p71, %p72
      %p74 = scmp.ne.s32.totalorder %s65, %s66
      %p75 = scmp.eq.s32.totalorder %s34, 0
      %p76 = por %p74, %p75
      %p77 = scmp.ne.s32.totalorder %s65, %s66
      %p78 = scmp.eq.s32.totalorder %s35, 1
      %p79 = por %p77, %p78
      %p81 = scmp.ne.s32.totalorder %s66, %s80
      %p82 = scmp.eq.s32.totalorder %s35, 0
      %p83 = por %p81, %p82
      %s85 = sadd.s32 %s84, 1
      %p88 = scmp.eq.s32.totalorder %s29, 1
      %p89 = scmp.ne.s32.totalorder %s84, %s86
      %p90 = scmp.eq.s32.totalorder %s29, 0
      %p91 = por %p89, %p90
      %p92 = scmp.ne.s32.totalorder %s84, %s86
      %p93 = scmp.eq.s32.totalorder %s34, 1
      %p94 = por %p92, %p93
      %p95 = scmp.ne.s32.totalorder %s86, %s87
      %p96 = scmp.eq.s32.totalorder %s34, 0
      %p97 = por %p95, %p96
      %p98 = scmp.ne.s32.totalorder %s86, %s87
      %p99 = scmp.eq.s32.totalorder %s35, 1
      %p100 = por %p98, %p99
      %p102 = scmp.ne.s32.totalorder %s87, %s101
      %p103 = scmp.eq.s32.totalorder %s35, 0
      %p104 = por %p102, %p103
      %s106 = sadd.s32 %s105, 1
      %p109 = scmp.eq.s32.totalorder %s29, 1
      %p110 = scmp.ne.s32.totalorder %s105, %s107
      %p111 = scmp.eq.s32.totalorder %s29, 0
      %p112 = por %p110, %p111
      %p113 = scmp.ne.s32.totalorder %s105, %s107
      %p114 = scmp.eq.s32.totalorder %s34, 1
      %p115 = por %p113, %p114
      %p116 = scmp.ne.s32.totalorder %s107, %s108
      %p117 = scmp.eq.s32.totalorder %s34, 0
      %p118 = por %p116, %p117
      %p119 = scmp.ne.s32.totalorder %s107, %s108
      %p120 = scmp.eq.s32.totalorder %s35, 1
      %p121 = por %p119, %p120
      %p123 = scmp.ne.s32.totalorder %s108, %s122
      %p124 = scmp.eq.s32.totalorder %s35, 0
      %p125 = por %p123, %p124
      %s127 = sadd.s32 %s126, 1
      %p130 = scmp.eq.s32.totalorder %s29, 1
      %p131 = scmp.ne.s32.totalorder %s126, %s128
      %p132 = scmp.eq.s32.totalorder %s29, 0
      %p133 = por %p131, %p132
      %p134 = scmp.ne.s32.totalorder %s126, %s128
      %p135 = scmp.eq.s32.totalorder %s34, 1
      %p136 = por %p134, %p135
      %p137 = scmp.ne.s32.totalorder %s128, %s129
      %p138 = scmp.eq.s32.totalorder %s34, 0
      %p139 = por %p137, %p138
      %p140 = scmp.ne.s32.totalorder %s128, %s129
      %p141 = scmp.eq.s32.totalorder %s35, 1
      %p142 = por %p140, %p141
      %p144 = scmp.ne.s32.totalorder %s129, %s143
      %p145 = scmp.eq.s32.totalorder %s35, 0
      %p146 = por %p144, %p145
      %s148 = sadd.s32 %s147, 1
      %p151 = scmp.eq.s32.totalorder %s29, 1
      %p152 = scmp.ne.s32.totalorder %s147, %s149
      %p153 = scmp.eq.s32.totalorder %s29, 0
      %p154 = por %p152, %p153
      %p155 = scmp.ne.s32.totalorder %s147, %s149
      %p156 = scmp.eq.s32.totalorder %s34, 1
      %p157 = por %p155, %p156
      %p158 = scmp.ne.s32.totalorder %s149, %s150
      %p159 = scmp.eq.s32.totalorder %s34, 0
      %p160 = por %p158, %p159
      %p161 = scmp.ne.s32.totalorder %s149, %s150
      %p162 = scmp.eq.s32.totalorder %s35, 1
      %p163 = por %p161, %p162
      %p165 = scmp.ne.s32.totalorder %s150, %s164
      %p166 = scmp.eq.s32.totalorder %s35, 0
      %p167 = por %p165, %p166
      %s169 = sadd.s32 %s168, 1
      %p172 = scmp.eq.s32.totalorder %s29, 1
      %p173 = scmp.ne.s32.totalorder %s168, %s170
      %p174 = scmp.eq.s32.totalorder %s29, 0
      %p175 = por %p173, %p174
      %p176 = scmp.ne.s32.totalorder %s168, %s170
      %p177 = scmp.eq.s32.totalorder %s34, 1
      %p178 = por %p176, %p177
      %p179 = scmp.ne.s32.totalorder %s170, %s171
      %p180 = scmp.eq.s32.totalorder %s34, 0
      %p181 = por %p179, %p180
      %p182 = scmp.ne.s32.totalorder %s170, %s171
      %p183 = scmp.eq.s32.totalorder %s35, 1
      %p184 = por %p182, %p183
      %p186 = scmp.ne.s32.totalorder %s171, %s185
      %p187 = scmp.eq.s32.totalorder %s35, 0
      %p188 = por %p186, %p187
      %s190 = sadd.s32 %s189, 1
      %p193 = scmp.eq.s32.totalorder %s29, 1
      %p194 = scmp.ne.s32.totalorder %s189, %s191
      %p195 = scmp.eq.s32.totalorder %s29, 0
      %p196 = por %p194, %p195
      %p197 = scmp.ne.s32.totalorder %s189, %s191
      %p198 = scmp.eq.s32.totalorder %s34, 1
      %p199 = por %p197, %p198
      %p200 = scmp.ne.s32.totalorder %s191, %s192
      %p201 = scmp.eq.s32.totalorder %s34, 0
      %p202 = por %p200, %p201
      %p203 = scmp.ne.s32.totalorder %s191, %s192
      %p204 = scmp.eq.s32.totalorder %s35, 1
      %p205 = por %p203, %p204
      %p207 = scmp.ne.s32.totalorder %s192, %s206
      %p208 = scmp.eq.s32.totalorder %s35, 0
      %p209 = por %p207, %p208
      %s210 = ssub.s32 %s29, %s36
      %p211 = scmp.eq.s32.totalorder %s210, 0
      %s213 = sadd.s32 %s212, 1
      %s214 = scalar_select %p211, %s212, %s213
      %p217 = pneg %p211
      %p218 = scmp.eq.s32.totalorder %s29, 1
      %p219 = por %p217, %p218
      %p220 = scmp.ne.s32.totalorder %s212, %s215
      %p221 = scmp.eq.s32.totalorder %s29, 0
      %p222 = por %p220, %p221
      %p223 = scmp.ne.s32.totalorder %s212, %s215
      %p224 = scmp.eq.s32.totalorder %s34, 1
      %p225 = por %p223, %p224
      %p226 = scmp.ne.s32.totalorder %s215, %s216
      %p227 = scmp.eq.s32.totalorder %s34, 0
      %p228 = por %p226, %p227
      %p229 = scmp.ne.s32.totalorder %s215, %s216
      %p230 = scmp.eq.s32.totalorder %s35, 1
      %p231 = por %p229, %p230
      %p233 = scmp.ne.s32.totalorder %s216, %s232
      %p234 = scmp.eq.s32.totalorder %s35, 0
      %p235 = por %p233, %p234
      %p236 = scmp.le.s32.totalorder 1, %s29
      %p237 = scmp.lt.s32.totalorder %s29, 3
      %p238 = pnand %p236, %p237
      %p239 = pneg %p238
      // Predicated region
      $region9: #{tpu_custom_call.1} parent=5 // pred_check
        _
      $region10: #{tpu_custom_call.1} parent=5 // pred_check_branch
        %241 = sbr.rel (%p238) target = $region12
      $region11: #{tpu_custom_call.1} parent=5 // pred_region
        %s242 = ssub.s32 %s29, 1
        // Predicated region
        $region13: #{tpu_custom_call.1} parent=11 // pred_check
          %p243 = pneg %p76
        $region14: #{tpu_custom_call.1} parent=11 // pred_check_branch
          %245 = sbr.rel (%p243) target = $region16
        $region15: #{tpu_custom_call.1} parent=11 // pred_region
          %s247 = ssub.s32 256, 256
          %248 = vsyncadd [#allocation9], %s247
          %s249 = sshll.u32 [#allocation8], 4
          %s250 = int_to_ptr.vmem [resolvable:$true] %s249
          %255 = dma.hbm_to_vmem [thread:$0]  %s2, 256, %s250, [#allocation9], 64, 64, 4
        $region16: #{tpu_custom_call.1} parent=11 // pred_fallthru
          _
        // Predicated region
        $region17: #{tpu_custom_call.1} parent=11 // pred_check
          %p256 = pneg %p97
        $region18: #{tpu_custom_call.1} parent=11 // pred_check_branch
          %258 = sbr.rel (%p256) target = $region20
        $region19: #{tpu_custom_call.1} parent=11 // pred_region
          %s260 = ssub.s32 16, 16
          %261 = vsyncadd [#allocation9], %s260
          %s263 = sshll.u32 [#allocation10], 4
          %s264 = int_to_ptr.vmem [resolvable:$true] %s263
          %266 = dma.hbm_to_vmem [thread:$0]  %s3, 16, %s264, [#allocation9]
        $region20: #{tpu_custom_call.1} parent=11 // pred_fallthru
          _
        // Predicated region
        $region21: #{tpu_custom_call.1} parent=11 // pred_check
          %p267 = pneg %p118
        $region22: #{tpu_custom_call.1} parent=11 // pred_check_branch
          %269 = sbr.rel (%p267) target = $region24
        $region23: #{tpu_custom_call.1} parent=11 // pred_region
          %s271 = ssub.s32 256, 256
          %272 = vsyncadd [#allocation12], %s271
          %s273 = sshll.u32 [#allocation11], 4
          %s274 = int_to_ptr.vmem [resolvable:$true] %s273
          %279 = dma.hbm_to_vmem [thread:$0]  %s4, 256, %s274, [#allocation12], 64, 64, 4
        $region24: #{tpu_custom_call.1} parent=11 // pred_fallthru
          _
        // Predicated region
        $region25: #{tpu_custom_call.1} parent=11 // pred_check
          %p280 = pneg %p139
        $region26: #{tpu_custom_call.1} parent=11 // pred_check_branch
          %282 = sbr.rel (%p280) target = $region28
        $region27: #{tpu_custom_call.1} parent=11 // pred_region
          %s284 = ssub.s32 256, 256
          %285 = vsyncadd [#allocation12], %s284
          %s286 = sshll.u32 [#allocation13], 4
          %s287 = int_to_ptr.vmem [resolvable:$true] %s286
          %292 = dma.hbm_to_vmem [thread:$0]  %s5, 256, %s287, [#allocation12], 64, 64, 4
        $region28: #{tpu_custom_call.1} parent=11 // pred_fallthru
          _
        // Predicated region
        $region29: #{tpu_custom_call.1} parent=11 // pred_check
          %p293 = pneg %p160
        $region30: #{tpu_custom_call.1} parent=11 // pred_check_branch
          %295 = sbr.rel (%p293) target = $region32
        $region31: #{tpu_custom_call.1} parent=11 // pred_region
          %s297 = ssub.s32 16, 16
          %298 = vsyncadd [#allocation15], %s297
          %s300 = sshll.u32 [#allocation14], 4
          %s301 = int_to_ptr.vmem [resolvable:$true] %s300
          %303 = dma.hbm_to_vmem [thread:$0]  %s6, 16, %s301, [#allocation15]
        $region32: #{tpu_custom_call.1} parent=11 // pred_fallthru
          _
        // Predicated region
        $region33: #{tpu_custom_call.1} parent=11 // pred_check
          %p304 = pneg %p181
        $region34: #{tpu_custom_call.1} parent=11 // pred_check_branch
          %306 = sbr.rel (%p304) target = $region36
        $region35: #{tpu_custom_call.1} parent=11 // pred_region
          %s308 = ssub.s32 512, 512
          %309 = vsyncadd [#allocation15], %s308
          %s310 = sshll.u32 [#allocation16], 4
          %s311 = int_to_ptr.vmem [resolvable:$true] %s310
          %316 = dma.hbm_to_vmem [thread:$0]  %s7, 512, %s311, [#allocation15], 64, 64, 4
        $region36: #{tpu_custom_call.1} parent=11 // pred_fallthru
          _
        // Predicated region
        $region37: #{tpu_custom_call.1} parent=11 // pred_check
          %p317 = pneg %p202
        $region38: #{tpu_custom_call.1} parent=11 // pred_check_branch
          %319 = sbr.rel (%p317) target = $region40
        $region39: #{tpu_custom_call.1} parent=11 // pred_region
          %s321 = ssub.s32 128, 128
          %322 = vsyncadd [#allocation18], %s321
          %s324 = sshll.u32 [#allocation17], 4
          %s325 = int_to_ptr.vmem [resolvable:$true] %s324
          %327 = dma.hbm_to_vmem [thread:$0]  %s8, 128, %s325, [#allocation18]
        $region40: #{tpu_custom_call.1} parent=11 // pred_fallthru
          _
      $region12: #{tpu_custom_call.1} parent=5 // pred_fallthru
        _
      %p328 = scmp.lt.s32.totalorder %s29, 2
      // Predicated region
      $region41: #{tpu_custom_call.1} parent=5 // pred_check
        %p329 = pneg %p328
      $region42: #{tpu_custom_call.1} parent=5 // pred_check_branch
        %331 = sbr.rel (%p329) target = $region44
      $region43: #{tpu_custom_call.1} parent=5 // pred_region
        // Predicated region
        $region45: #{tpu_custom_call.1} parent=43 // pred_check
          %p332 = pneg %p49
        $region46: #{tpu_custom_call.1} parent=43 // pred_check_branch
          %334 = sbr.rel (%p332) target = $region48
        $region47: #{tpu_custom_call.1} parent=43 // pred_region
          %s335 = sand.u32 %s39, 1
          %s336 = scalar_lea.sflag [#allocation6], %s335
          %s337 = sand.u32 %s39, 1
          %s338 = smul.addr %s337, 8
          %s339 = scalar_lea.vmem [#allocation5], %s338
          %s341 = ssub.s32 128, 128
          %342 = vsyncadd %s336, %s341
          %s343 = smul.addr %s29, 128
          %s344 = scalar_lea.hbm %s1, %s343
          %s346 = sshll.u32 %s339, 4
          %s347 = int_to_ptr.vmem [resolvable:$true] %s346
          %349 = dma.hbm_to_vmem [thread:$0]  %s344, 128, %s347, %s336
        $region48: #{tpu_custom_call.1} parent=43 // pred_fallthru
          _
      $region44: #{tpu_custom_call.1} parent=5 // pred_fallthru
        _
      %p350 = scmp.le.s32.totalorder 1, %s29
      %p351 = scmp.lt.s32.totalorder %s29, 3
      %p352 = pnand %p350, %p351
      %p353 = pneg %p352
      // Predicated region
      $region49: #{tpu_custom_call.1} parent=5 // pred_check
        _
      $region50: #{tpu_custom_call.1} parent=5 // pred_check_branch
        %355 = sbr.rel (%p352) target = $region52
      $region51: #{tpu_custom_call.1} parent=5 // pred_region
        %s356 = ssub.s32 %s29, 1
        %s357 = sand.u32 %s42, 1
        %s358 = scalar_lea.sflag [#allocation6], %s357
        %s359 = sand.u32 %s42, 1
        %s360 = smul.addr %s359, 8
        %s361 = scalar_lea.vmem [#allocation5], %s360
        // Predicated region
        $region53: #{tpu_custom_call.1} parent=51 // pred_check
          %p362 = pneg %p55
        $region54: #{tpu_custom_call.1} parent=51 // pred_check_branch
          %364 = sbr.rel (%p362) target = $region56
        $region55: #{tpu_custom_call.1} parent=51 // pred_region
          %365 = dma.done %s358, 128
        $region56: #{tpu_custom_call.1} parent=51 // pred_fallthru
          _
        // Predicated region
        $region57: #{tpu_custom_call.1} parent=51 // pred_check
          %p366 = pneg %p76
        $region58: #{tpu_custom_call.1} parent=51 // pred_check_branch
          %368 = sbr.rel (%p366) target = $region60
        $region59: #{tpu_custom_call.1} parent=51 // pred_region
          %369 = dma.done [#allocation9], 256
        $region60: #{tpu_custom_call.1} parent=51 // pred_fallthru
          _
        // Predicated region
        $region61: #{tpu_custom_call.1} parent=51 // pred_check
          %p370 = pneg %p97
        $region62: #{tpu_custom_call.1} parent=51 // pred_check_branch
          %372 = sbr.rel (%p370) target = $region64
        $region63: #{tpu_custom_call.1} parent=51 // pred_region
          %373 = dma.done [#allocation9], 16
        $region64: #{tpu_custom_call.1} parent=51 // pred_fallthru
          _
        // Predicated region
        $region65: #{tpu_custom_call.1} parent=51 // pred_check
          %p374 = pneg %p118
        $region66: #{tpu_custom_call.1} parent=51 // pred_check_branch
          %376 = sbr.rel (%p374) target = $region68
        $region67: #{tpu_custom_call.1} parent=51 // pred_region
          %377 = dma.done [#allocation12], 256
        $region68: #{tpu_custom_call.1} parent=51 // pred_fallthru
          _
        // Predicated region
        $region69: #{tpu_custom_call.1} parent=51 // pred_check
          %p378 = pneg %p139
        $region70: #{tpu_custom_call.1} parent=51 // pred_check_branch
          %380 = sbr.rel (%p378) target = $region72
        $region71: #{tpu_custom_call.1} parent=51 // pred_region
          %381 = dma.done [#allocation12], 256
        $region72: #{tpu_custom_call.1} parent=51 // pred_fallthru
          _
        // Predicated region
        $region73: #{tpu_custom_call.1} parent=51 // pred_check
          %p382 = pneg %p160
        $region74: #{tpu_custom_call.1} parent=51 // pred_check_branch
          %384 = sbr.rel (%p382) target = $region76
        $region75: #{tpu_custom_call.1} parent=51 // pred_region
          %385 = dma.done [#allocation15], 16
        $region76: #{tpu_custom_call.1} parent=51 // pred_fallthru
          _
        // Predicated region
        $region77: #{tpu_custom_call.1} parent=51 // pred_check
          %p386 = pneg %p181
        $region78: #{tpu_custom_call.1} parent=51 // pred_check_branch
          %388 = sbr.rel (%p386) target = $region80
        $region79: #{tpu_custom_call.1} parent=51 // pred_region
          %389 = dma.done [#allocation15], 512
        $region80: #{tpu_custom_call.1} parent=51 // pred_fallthru
          _
        // Predicated region
        $region81: #{tpu_custom_call.1} parent=51 // pred_check
          %p390 = pneg %p202
        $region82: #{tpu_custom_call.1} parent=51 // pred_check_branch
          %392 = sbr.rel (%p390) target = $region84
        $region83: #{tpu_custom_call.1} parent=51 // pred_region
          %393 = dma.done [#allocation18], 128
        $region84: #{tpu_custom_call.1} parent=51 // pred_fallthru
          _
        %s394 = sand.u32 %s42, 1
        %s395 = scalar_lea.sflag [#allocation6], %s394
        %s396 = sand.u32 %s42, 1
        %s397 = smul.addr %s396, 8
        %s398 = scalar_lea.vmem [#allocation5], %s397
        %p399 = pneg %p55
        %p400 = pneg %p52
        %p401 = pneg %p76
        %p402 = pneg %p73
        %p403 = pneg %p97
        %p404 = pneg %p94
        %p405 = pneg %p118
        %p406 = pneg %p115
        %p407 = pneg %p139
        %p408 = pneg %p136
        %p409 = pneg %p160
        %p410 = pneg %p157
        %p411 = pneg %p181
        %p412 = pneg %p178
        %p413 = pneg %p202
        %p414 = pneg %p199
        %p415 = pneg %p228
        %p416 = pneg %p225
        %s417 = sand.u32 %s215, 1
        %s418 = scalar_lea.sflag [#allocation7], %s417
        %s419 = sand.u32 %s215, 1
        %s420 = smul.addr %s419, 8
        %s421 = scalar_lea.vmem [#allocation19], %s420
        %v423 = vld [vmem:[%s361] sm:$0xff]
        %v424 = vld [vmem:[#allocation17] sm:$0x3f]
        %v425 = vpack.c.bf16 %v423, %v423
        %v426 = vld [vmem:[#allocation8] sm:$0xf]
        %v427 = vld [vmem:[#allocation8 + $0x4] sm:$0xf]
        %v428 = vld [vmem:[#allocation8 + $0x8] sm:$0xf]
        %v429 = vld [vmem:[#allocation8 + $0xc] sm:$0xf]
        %v430 = vld [vmem:[#allocation10] sm:$0x1]
        %v432 = vlaneseq
        %v433 = vshrl.u32 %v432, 7
        %v434 = vsub.s32 0, %v433
        %v435 = vrot.slane %v430, %v434
        %v441 = vunpack.c.l.b16 %v426
        %v442 = vunpack.c.l.b16 %v427
        %v443 = vunpack.c.l.b16 %v428
        %v444 = vunpack.c.l.b16 %v429
        %v445 = vpack.c.b16 %v442, %v441
        %v446 = vpack.c.b16 %v444, %v443
        %vm449 = vcmask 261120
        %v451 = vsel %vm449, %v425, 0
        %453 = vmatprep.subr.bf16.mxu0 0
        %454 = vmatpush1.bf16.msra.mxu0 %v445
        %455 = vmatprep.subr.bf16.mxu0 0
        %456 = vmatpush1.bf16.msra.mxu0 %v446
        %457 = vmatprep.subr.bf16.mxu0 0
        %458 = vmatpush1.bf16.msra.mxu0 0
        %459 = vmatprep.subr.bf16.mxu0 0
        %460 = vmatpush1.bf16.msra.mxu0 0
        %461 = vmatprep.subr.bf16.mxu0 0
        %462 = vmatpush1.bf16.msra.mxu0 0
        %463 = vmatprep.subr.bf16.mxu0 0
        %464 = vmatpush1.bf16.msra.mxu0 0
        %465 = vmatprep.subr.bf16.mxu0 0
        %466 = vmatpush1.bf16.msra.mxu0 0
        %467 = vmatprep.subr.bf16.mxu0 0
        %468 = vmatpush1.bf16.msra.mxu0 0
        %469 = vmatprep.subr.bf16.mxu0 0
        %470 = vmatpush1.bf16.msra.mxu0 0
        %471 = vmatprep.subr.bf16.mxu0 0
        %472 = vmatpush1.bf16.msra.mxu0 0
        %473 = vmatprep.subr.bf16.mxu0 0
        %474 = vmatpush1.bf16.msra.mxu0 0
        %475 = vmatprep.subr.bf16.mxu0 0
        %476 = vmatpush1.bf16.msra.mxu0 0
        %477 = vmatprep.subr.bf16.mxu0 0
        %478 = vmatpush1.bf16.msra.mxu0 0
        %479 = vmatprep.subr.bf16.mxu0 0
        %480 = vmatpush1.bf16.msra.mxu0 0
        %481 = vmatprep.subr.bf16.mxu0 0
        %482 = vmatpush1.bf16.msra.mxu0 0
        %483 = vmatprep.subr.bf16.mxu0 0
        %484 = vmatpush1.bf16.msra.mxu0 0
        %485 = vmatprep.mubr.bf16.mxu0 0
        %486 = vmatmul.mubr.bf16.gmra.mrb[0].mxu0 %v451
        %v487 = vpop.f32.mrb[0].mxu0
        %v488 = vadd.f32 %v435, %v487
        %v489 = vpop.f32.mrb[0].mxu0
        %v490 = vpop.f32.mrb[0].mxu0
        %v491 = vpop.f32.mrb[0].mxu0
        %492 = vdwg.mxu0
        %v493 = vlaneseq
        %v494 = vand.u32 %v493, 127
        %s495 = sld [smem:[#allocation4 + %s34]]
        %v496 = vstv %s495
        %vm497 = vcmp.lt.s32.totalorder %v494, %v496
        %v498 = vsel %vm497, 0.0, -1e+09
        %v499 = vpack.c.bf16 %v488, %v488
        %501 = vrot.lane.b32.xlu0 %v499, 96
        %v502 = vpop.permute.xlu0 %501
        %vm503 = vcmask 130048
        %v505 = vsel %vm503, %v499, 0
        %v508 = vsel %vm503, %v502, 0
        %510 = vmatprep.subr.bf16.mxu0 0
        %511 = vmatpush1.bf16.xpose.msra.mxu0 %v508
        %512 = vmatprep.subr.bf16.mxu0 0
        %513 = vmatpush1.bf16.xpose.msra.mxu0 0
        %514 = vmatprep.subr.bf16.mxu0 0
        %515 = vmatpush1.bf16.xpose.msra.mxu0 0
        %516 = vmatprep.subr.bf16.mxu0 0
        %517 = vmatpush1.bf16.xpose.msra.mxu0 0
        %518 = vmatprep.subr.bf16.mxu0 0
        %519 = vmatpush1.bf16.xpose.msra.mxu0 0
        %520 = vmatprep.subr.bf16.mxu0 0
        %521 = vmatpush1.bf16.xpose.msra.mxu0 0
        %522 = vmatprep.subr.bf16.mxu0 0
        %523 = vmatpush1.bf16.xpose.msra.mxu0 0
        %524 = vmatprep.subr.bf16.mxu0 0
        %525 = vmatpush1.bf16.xpose.msra.mxu0 0
        %526 = vmatprep.subr.bf16.mxu0 0
        %527 = vmatpush1.bf16.xpose.msra.mxu0 0
        %528 = vmatprep.subr.bf16.mxu0 0
        %529 = vmatpush1.bf16.xpose.msra.mxu0 0
        %530 = vmatprep.subr.bf16.mxu0 0
        %531 = vmatpush1.bf16.xpose.msra.mxu0 0
        %532 = vmatprep.subr.bf16.mxu0 0
        %533 = vmatpush1.bf16.xpose.msra.mxu0 0
        %534 = vmatprep.subr.bf16.mxu0 0
        %535 = vmatpush1.bf16.xpose.msra.mxu0 0
        %536 = vmatprep.subr.bf16.mxu0 0
        %537 = vmatpush1.bf16.xpose.msra.mxu0 0
        %538 = vmatprep.subr.bf16.mxu0 0
        %539 = vmatpush1.bf16.xpose.msra.mxu0 0
        %540 = vmatprep.subr.bf16.mxu0 0
        %541 = vmatpush1.bf16.xpose.msra.mxu0 0
        %542 = vmatprep.mubr.bf16.mxu0 0
        %543 = vmatmul.mubr.bf16.gmra.mrb[0].mxu0 %v505
        %v544 = vpop.f32.mrb[0].mxu0
        %v545 = vadd.f32 %v498, %v544
        %v546 = vpop.f32.mrb[0].mxu0
        %v547 = vpop.f32.mrb[0].mxu0
        %v548 = vpop.f32.mrb[0].mxu0
        %549 = vdwg.mxu0
        %vm550 = vcmask 64512
        %v551 = vsel %vm550, %v545, -inf
        %552 = vmax.xlane.f32.xlu0 %v551
        %v553 = vpop.xlane.xlu0 %552
        %v554 = vsub.f32 %v545, %v553
        %v555 = vmul.f32 %v554, 1.442695
        %v556 = vpow.pop %v555
        %v557 = vsel %vm550, %v556, 0.0
        %558 = vadd.xlane.f32.xlu0 %v557
        %v559 = vpop.xlane.xlu0 %558
        %v560 = vrcp.pop %v559
        %v561 = vmul.f32 %v556, %v560
        %v562 = vpack.c.bf16 %v561, %v561
        %563 = vrot.lane.b32.xlu0 %v499, 64
        %v564 = vpop.permute.xlu0 %563
        %v566 = vsel %vm550, %v562, 0
        %vm568 = vcmask 1043456
        %v570 = vsel %vm568, %v564, 0
        %572 = vmatprep.subr.bf16.mxu0 0
        %573 = vmatpush1.bf16.msra.mxu0 %v570
        %574 = vmatprep.subr.bf16.mxu0 0
        %575 = vmatpush1.bf16.msra.mxu0 0
        %576 = vmatprep.subr.bf16.mxu0 0
        %577 = vmatpush1.bf16.msra.mxu0 0
        %578 = vmatprep.subr.bf16.mxu0 0
        %579 = vmatpush1.bf16.msra.mxu0 0
        %580 = vmatprep.subr.bf16.mxu0 0
        %581 = vmatpush1.bf16.msra.mxu0 0
        %582 = vmatprep.subr.bf16.mxu0 0
        %583 = vmatpush1.bf16.msra.mxu0 0
        %584 = vmatprep.subr.bf16.mxu0 0
        %585 = vmatpush1.bf16.msra.mxu0 0
        %586 = vmatprep.subr.bf16.mxu0 0
        %587 = vmatpush1.bf16.msra.mxu0 0
        %588 = vmatprep.subr.bf16.mxu0 0
        %589 = vmatpush1.bf16.msra.mxu0 0
        %590 = vmatprep.subr.bf16.mxu0 0
        %591 = vmatpush1.bf16.msra.mxu0 0
        %592 = vmatprep.subr.bf16.mxu0 0
        %593 = vmatpush1.bf16.msra.mxu0 0
        %594 = vmatprep.subr.bf16.mxu0 0
        %595 = vmatpush1.bf16.msra.mxu0 0
        %596 = vmatprep.subr.bf16.mxu0 0
        %597 = vmatpush1.bf16.msra.mxu0 0
        %598 = vmatprep.subr.bf16.mxu0 0
        %599 = vmatpush1.bf16.msra.mxu0 0
        %600 = vmatprep.subr.bf16.mxu0 0
        %601 = vmatpush1.bf16.msra.mxu0 0
        %602 = vmatprep.subr.bf16.mxu0 0
        %603 = vmatpush1.bf16.msra.mxu0 0
        %604 = vmatprep.mubr.bf16.mxu0 0
        %605 = vmatmul.mubr.bf16.gmra.mrb[0].mxu0 %v566
        %v606 = vpop.f32.mrb[0].mxu0
        %v607 = vadd.f32 0.0, %v606
        %v608 = vpop.f32.mrb[0].mxu0
        %v609 = vpop.f32.mrb[0].mxu0
        %v610 = vpop.f32.mrb[0].mxu0
        %611 = vdwg.mxu0
        %612 = vrot.lane.b32.xlu0 %v499, 112
        %v613 = vpop.permute.xlu0 %612
        %614 = vrot.lane.b32.xlu0 %v499, 80
        %v615 = vpop.permute.xlu0 %614
        %v617 = vsel %vm503, %v613, 0
        %v620 = vsel %vm503, %v615, 0
        %622 = vmatprep.subr.bf16.mxu0 0
        %623 = vmatpush1.bf16.xpose.msra.mxu0 %v620
        %624 = vmatprep.subr.bf16.mxu0 0
        %625 = vmatpush1.bf16.xpose.msra.mxu0 0
        %626 = vmatprep.subr.bf16.mxu0 0
        %627 = vmatpush1.bf16.xpose.msra.mxu0 0
        %628 = vmatprep.subr.bf16.mxu0 0
        %629 = vmatpush1.bf16.xpose.msra.mxu0 0
        %630 = vmatprep.subr.bf16.mxu0 0
        %631 = vmatpush1.bf16.xpose.msra.mxu0 0
        %632 = vmatprep.subr.bf16.mxu0 0
        %633 = vmatpush1.bf16.xpose.msra.mxu0 0
        %634 = vmatprep.subr.bf16.mxu0 0
        %635 = vmatpush1.bf16.xpose.msra.mxu0 0
        %636 = vmatprep.subr.bf16.mxu0 0
        %637 = vmatpush1.bf16.xpose.msra.mxu0 0
        %638 = vmatprep.subr.bf16.mxu0 0
        %639 = vmatpush1.bf16.xpose.msra.mxu0 0
        %640 = vmatprep.subr.bf16.mxu0 0
        %641 = vmatpush1.bf16.xpose.msra.mxu0 0
        %642 = vmatprep.subr.bf16.mxu0 0
        %643 = vmatpush1.bf16.xpose.msra.mxu0 0
        %644 = vmatprep.subr.bf16.mxu0 0
        %645 = vmatpush1.bf16.xpose.msra.mxu0 0
        %646 = vmatprep.subr.bf16.mxu0 0
        %647 = vmatpush1.bf16.xpose.msra.mxu0 0
        %648 = vmatprep.subr.bf16.mxu0 0
        %649 = vmatpush1.bf16.xpose.msra.mxu0 0
        %650 = vmatprep.subr.bf16.mxu0 0
        %651 = vmatpush1.bf16.xpose.msra.mxu0 0
        %652 = vmatprep.subr.bf16.mxu0 0
        %653 = vmatpush1.bf16.xpose.msra.mxu0 0
        %654 = vmatprep.mubr.bf16.mxu0 0
        %655 = vmatmul.mubr.bf16.gmra.mrb[0].mxu0 %v617
        %v656 = vpop.f32.mrb[0].mxu0
        %v657 = vadd.f32 %v498, %v656
        %v658 = vpop.f32.mrb[0].mxu0
        %v659 = vpop.f32.mrb[0].mxu0
        %v660 = vpop.f32.mrb[0].mxu0
        %661 = vdwg.mxu0
        %v662 = vsel %vm550, %v657, -inf
        %663 = vmax.xlane.f32.xlu0 %v662
        %v664 = vpop.xlane.xlu0 %663
        %v665 = vsub.f32 %v657, %v664
        %v666 = vmul.f32 %v665, 1.442695
        %v667 = vpow.pop %v666
        %v668 = vsel %vm550, %v667, 0.0
        %669 = vadd.xlane.f32.xlu0 %v668
        %v670 = vpop.xlane.xlu0 %669
        %v671 = vrcp.pop %v670
        %v672 = vmul.f32 %v667, %v671
        %v673 = vpack.c.bf16 %v672, %v672
        %674 = vrot.lane.b32.xlu0 %v499, 48
        %v675 = vpop.permute.xlu0 %674
        %v677 = vsel %vm550, %v673, 0
        %v680 = vsel %vm568, %v675, 0
        %682 = vmatprep.subr.bf16.mxu0 0
        %683 = vmatpush1.bf16.msra.mxu0 %v680
        %684 = vmatprep.subr.bf16.mxu0 0
        %685 = vmatpush1.bf16.msra.mxu0 0
        %686 = vmatprep.subr.bf16.mxu0 0
        %687 = vmatpush1.bf16.msra.mxu0 0
        %688 = vmatprep.subr.bf16.mxu0 0
        %689 = vmatpush1.bf16.msra.mxu0 0
        %690 = vmatprep.subr.bf16.mxu0 0
        %691 = vmatpush1.bf16.msra.mxu0 0
        %692 = vmatprep.subr.bf16.mxu0 0
        %693 = vmatpush1.bf16.msra.mxu0 0
        %694 = vmatprep.subr.bf16.mxu0 0
        %695 = vmatpush1.bf16.msra.mxu0 0
        %696 = vmatprep.subr.bf16.mxu0 0
        %697 = vmatpush1.bf16.msra.mxu0 0
        %698 = vmatprep.subr.bf16.mxu0 0
        %699 = vmatpush1.bf16.msra.mxu0 0
        %700 = vmatprep.subr.bf16.mxu0 0
        %701 = vmatpush1.bf16.msra.mxu0 0
        %702 = vmatprep.subr.bf16.mxu0 0
        %703 = vmatpush1.bf16.msra.mxu0 0
        %704 = vmatprep.subr.bf16.mxu0 0
        %705 = vmatpush1.bf16.msra.mxu0 0
        %706 = vmatprep.subr.bf16.mxu0 0
        %707 = vmatpush1.bf16.msra.mxu0 0
        %708 = vmatprep.subr.bf16.mxu0 0
        %709 = vmatpush1.bf16.msra.mxu0 0
        %710 = vmatprep.subr.bf16.mxu0 0
        %711 = vmatpush1.bf16.msra.mxu0 0
        %712 = vmatprep.subr.bf16.mxu0 0
        %713 = vmatpush1.bf16.msra.mxu0 0
        %714 = vmatprep.mubr.bf16.mxu0 0
        %715 = vmatmul.mubr.bf16.gmra.mrb[0].mxu0 %v677
        %v716 = vpop.f32.mrb[0].mxu0
        %v717 = vadd.f32 0.0, %v716
        %v718 = vpop.f32.mrb[0].mxu0
        %v719 = vpop.f32.mrb[0].mxu0
        %v720 = vpop.f32.mrb[0].mxu0
        %721 = vdwg.mxu0
        %723 = vrot.lane.b32.xlu0 %v717, 16
        %v724 = vpop.permute.xlu0 %723
        %v726 = vsel %vm503, %v607, %v724
        %v727 = vpack.c.bf16 %v726, %v726
        %vm728 = vcmask 257024
        %729 = vst.msk [vmem:[#allocation2] sm:$0xf] %vm728, %v727
        %v730 = vld [vmem:[#allocation2] sm:$0xf]
        %v731 = vld [vmem:[#allocation11] sm:$0xf]
        %v732 = vld [vmem:[#allocation11 + $0x4] sm:$0xf]
        %v733 = vld [vmem:[#allocation11 + $0x8] sm:$0xf]
        %v734 = vld [vmem:[#allocation11 + $0xc] sm:$0xf]
        %v735 = vlaneseq
        %v736 = vshrl.u32 %v735, 7
        %v737 = vsub.s32 0, %v736
        %v738 = vrot.slane %v424, %v737
        %v743 = vunpack.c.l.b16 %v731
        %v744 = vunpack.c.l.b16 %v732
        %v745 = vunpack.c.l.b16 %v733
        %v746 = vunpack.c.l.b16 %v734
        %v747 = vpack.c.b16 %v744, %v743
        %v748 = vpack.c.b16 %v746, %v745
        %v752 = vsel %vm449, %v730, 0
        %754 = vmatprep.subr.bf16.mxu0 0
        %755 = vmatpush1.bf16.msra.mxu0 %v747
        %756 = vmatprep.subr.bf16.mxu0 0
        %757 = vmatpush1.bf16.msra.mxu0 %v748
        %758 = vmatprep.subr.bf16.mxu0 0
        %759 = vmatpush1.bf16.msra.mxu0 0
        %760 = vmatprep.subr.bf16.mxu0 0
        %761 = vmatpush1.bf16.msra.mxu0 0
        %762 = vmatprep.subr.bf16.mxu0 0
        %763 = vmatpush1.bf16.msra.mxu0 0
        %764 = vmatprep.subr.bf16.mxu0 0
        %765 = vmatpush1.bf16.msra.mxu0 0
        %766 = vmatprep.subr.bf16.mxu0 0
        %767 = vmatpush1.bf16.msra.mxu0 0
        %768 = vmatprep.subr.bf16.mxu0 0
        %769 = vmatpush1.bf16.msra.mxu0 0
        %770 = vmatprep.subr.bf16.mxu0 0
        %771 = vmatpush1.bf16.msra.mxu0 0
        %772 = vmatprep.subr.bf16.mxu0 0
        %773 = vmatpush1.bf16.msra.mxu0 0
        %774 = vmatprep.subr.bf16.mxu0 0
        %775 = vmatpush1.bf16.msra.mxu0 0
        %776 = vmatprep.subr.bf16.mxu0 0
        %777 = vmatpush1.bf16.msra.mxu0 0
        %778 = vmatprep.subr.bf16.mxu0 0
        %779 = vmatpush1.bf16.msra.mxu0 0
        %780 = vmatprep.subr.bf16.mxu0 0
        %781 = vmatpush1.bf16.msra.mxu0 0
        %782 = vmatprep.subr.bf16.mxu0 0
        %783 = vmatpush1.bf16.msra.mxu0 0
        %784 = vmatprep.subr.bf16.mxu0 0
        %785 = vmatpush1.bf16.msra.mxu0 0
        %786 = vmatprep.mubr.bf16.mxu0 0
        %787 = vmatmul.mubr.bf16.gmra.mrb[0].mxu0 %v752
        %v788 = vpop.f32.mrb[0].mxu0
        %v789 = vadd.f32 %v738, %v788
        %v790 = vpop.f32.mrb[0].mxu0
        %v791 = vpop.f32.mrb[0].mxu0
        %v792 = vpop.f32.mrb[0].mxu0
        %793 = vdwg.mxu0
        %v794 = vadd.f32 %v423, %v789
        %v795 = vsel %vm449, %v794, 0.0
        %796 = vadd.xlane.f32.xlu0 %v795
        %v797 = vpop.xlane.xlu0 %796
        %v798 = vrcp.pop 32.0
        %v799 = vmul.f32 %v797, %v798
        %v800 = vmul.f32 %v794, %v794
        %v801 = vsel %vm449, %v800, 0.0
        %802 = vadd.xlane.f32.xlu0 %v801
        %v803 = vpop.xlane.xlu0 %802
        %v804 = vmul.f32 %v803, %v798
        %v805 = vsub.f32 %v794, %v799
        %v806 = vmul.f32 %v799, %v799
        %v807 = vsub.f32 %v804, %v806
        %v808 = vadd.f32 %v807, 1e-05
        %v809 = vrsqrt.pop %v808
        %v810 = vmul.f32 %v805, %v809
        %v811 = vlaneseq
        %v812 = vshrl.u32 %v811, 7
        %v813 = vsub.s32 1, %v812
        %v814 = vrot.slane %v424, %v813
        %v815 = vmul.f32 %v810, %v814
        %v816 = vlaneseq
        %v817 = vshrl.u32 %v816, 7
        %v818 = vsub.s32 2, %v817
        %v819 = vrot.slane %v424, %v818
        %v820 = vadd.f32 %v815, %v819
        %v821 = vpack.c.bf16 %v820, %v820
        %v822 = vld [vmem:[#allocation13] sm:$0xf]
        %v823 = vld [vmem:[#allocation13 + $0x4] sm:$0xf]
        %v824 = vld [vmem:[#allocation13 + $0x8] sm:$0xf]
        %v825 = vld [vmem:[#allocation13 + $0xc] sm:$0xf]
        %v826 = vld [vmem:[#allocation14] sm:$0x1]
        %v828 = vlaneseq
        %v829 = vshrl.u32 %v828, 7
        %v830 = vsub.s32 0, %v829
        %v831 = vrot.slane %v826, %v830
        %v837 = vunpack.c.l.b16 %v822
        %v838 = vunpack.c.l.b16 %v823
        %v839 = vunpack.c.l.b16 %v824
        %v840 = vunpack.c.l.b16 %v825
        %v841 = vpack.c.b16 %v838, %v837
        %v842 = vpack.c.b16 %v840, %v839
        %v846 = vsel %vm449, %v821, 0
        %848 = vmatprep.subr.bf16.mxu0 0
        %849 = vmatpush1.bf16.msra.mxu0 %v841
        %850 = vmatprep.subr.bf16.mxu0 0
        %851 = vmatpush1.bf16.msra.mxu0 %v842
        %852 = vmatprep.subr.bf16.mxu0 0
        %853 = vmatpush1.bf16.msra.mxu0 0
        %854 = vmatprep.subr.bf16.mxu0 0
        %855 = vmatpush1.bf16.msra.mxu0 0
        %856 = vmatprep.subr.bf16.mxu0 0
        %857 = vmatpush1.bf16.msra.mxu0 0
        %858 = vmatprep.subr.bf16.mxu0 0
        %859 = vmatpush1.bf16.msra.mxu0 0
        %860 = vmatprep.subr.bf16.mxu0 0
        %861 = vmatpush1.bf16.msra.mxu0 0
        %862 = vmatprep.subr.bf16.mxu0 0
        %863 = vmatpush1.bf16.msra.mxu0 0
        %864 = vmatprep.subr.bf16.mxu0 0
        %865 = vmatpush1.bf16.msra.mxu0 0
        %866 = vmatprep.subr.bf16.mxu0 0
        %867 = vmatpush1.bf16.msra.mxu0 0
        %868 = vmatprep.subr.bf16.mxu0 0
        %869 = vmatpush1.bf16.msra.mxu0 0
        %870 = vmatprep.subr.bf16.mxu0 0
        %871 = vmatpush1.bf16.msra.mxu0 0
        %872 = vmatprep.subr.bf16.mxu0 0
        %873 = vmatpush1.bf16.msra.mxu0 0
        %874 = vmatprep.subr.bf16.mxu0 0
        %875 = vmatpush1.bf16.msra.mxu0 0
        %876 = vmatprep.subr.bf16.mxu0 0
        %877 = vmatpush1.bf16.msra.mxu0 0
        %878 = vmatprep.subr.bf16.mxu0 0
        %879 = vmatpush1.bf16.msra.mxu0 0
        %880 = vmatprep.mubr.bf16.mxu0 0
        %881 = vmatmul.mubr.bf16.gmra.mrb[0].mxu0 %v846
        %v882 = vpop.f32.mrb[0].mxu0
        %v883 = vadd.f32 %v831, %v882
        %v884 = vpop.f32.mrb[0].mxu0
        %v885 = vpop.f32.mrb[0].mxu0
        %v886 = vpop.f32.mrb[0].mxu0
        %887 = vdwg.mxu0
        %v888 = vmax.f32 %v883, 0.0
        %v889 = vpack.c.bf16 %v888, %v888
        %v890 = vld [vmem:[#allocation16] sm:$0xf]
        %v891 = vld [vmem:[#allocation16 + $0x4] sm:$0xf]
        %v892 = vld [vmem:[#allocation16 + $0x8] sm:$0xf]
        %v893 = vld [vmem:[#allocation16 + $0xc] sm:$0xf]
        %v894 = vld [vmem:[#allocation16 + $0x10] sm:$0xf]
        %v895 = vld [vmem:[#allocation16 + $0x14] sm:$0xf]
        %v896 = vld [vmem:[#allocation16 + $0x18] sm:$0xf]
        %v897 = vld [vmem:[#allocation16 + $0x1c] sm:$0xf]
        %v898 = vlaneseq
        %v899 = vshrl.u32 %v898, 7
        %v900 = vsub.s32 3, %v899
        %v901 = vrot.slane %v424, %v900
        %v910 = vunpack.c.l.b16 %v890
        %v911 = vunpack.c.l.b16 %v891
        %v912 = vunpack.c.l.b16 %v892
        %v913 = vunpack.c.l.b16 %v893
        %v914 = vunpack.c.l.b16 %v894
        %v915 = vunpack.c.l.b16 %v895
        %v916 = vunpack.c.l.b16 %v896
        %v917 = vunpack.c.l.b16 %v897
        %v918 = vpack.c.b16 %v911, %v910
        %v919 = vpack.c.b16 %v913, %v912
        %v920 = vpack.c.b16 %v915, %v914
        %v921 = vpack.c.b16 %v917, %v916
        %vm926 = vcmask 523264
        %v928 = vsel %vm926, %v889, 0
        %930 = vmatprep.subr.bf16.mxu0 0
        %931 = vmatpush1.bf16.msra.mxu0 %v918
        %932 = vmatprep.subr.bf16.mxu0 0
        %933 = vmatpush1.bf16.msra.mxu0 %v919
        %934 = vmatprep.subr.bf16.mxu0 0
        %935 = vmatpush1.bf16.msra.mxu0 %v920
        %936 = vmatprep.subr.bf16.mxu0 0
        %937 = vmatpush1.bf16.msra.mxu0 %v921
        %938 = vmatprep.subr.bf16.mxu0 0
        %939 = vmatpush1.bf16.msra.mxu0 0
        %940 = vmatprep.subr.bf16.mxu0 0
        %941 = vmatpush1.bf16.msra.mxu0 0
        %942 = vmatprep.subr.bf16.mxu0 0
        %943 = vmatpush1.bf16.msra.mxu0 0
        %944 = vmatprep.subr.bf16.mxu0 0
        %945 = vmatpush1.bf16.msra.mxu0 0
        %946 = vmatprep.subr.bf16.mxu0 0
        %947 = vmatpush1.bf16.msra.mxu0 0
        %948 = vmatprep.subr.bf16.mxu0 0
        %949 = vmatpush1.bf16.msra.mxu0 0
        %950 = vmatprep.subr.bf16.mxu0 0
        %951 = vmatpush1.bf16.msra.mxu0 0
        %952 = vmatprep.subr.bf16.mxu0 0
        %953 = vmatpush1.bf16.msra.mxu0 0
        %954 = vmatprep.subr.bf16.mxu0 0
        %955 = vmatpush1.bf16.msra.mxu0 0
        %956 = vmatprep.subr.bf16.mxu0 0
        %957 = vmatpush1.bf16.msra.mxu0 0
        %958 = vmatprep.subr.bf16.mxu0 0
        %959 = vmatpush1.bf16.msra.mxu0 0
        %960 = vmatprep.subr.bf16.mxu0 0
        %961 = vmatpush1.bf16.msra.mxu0 0
        %962 = vmatprep.mubr.bf16.mxu0 0
        %963 = vmatmul.mubr.bf16.gmra.mrb[0].mxu0 %v928
        %v964 = vpop.f32.mrb[0].mxu0
        %v965 = vadd.f32 %v901, %v964
        %v966 = vpop.f32.mrb[0].mxu0
        %v967 = vpop.f32.mrb[0].mxu0
        %v968 = vpop.f32.mrb[0].mxu0
        %969 = vdwg.mxu0
        %v970 = vadd.f32 %v820, %v965
        %v971 = vsel %vm449, %v970, 0.0
        %972 = vadd.xlane.f32.xlu0 %v971
        %v973 = vpop.xlane.xlu0 %972
        %v974 = vmul.f32 %v973, %v798
        %v975 = vmul.f32 %v970, %v970
        %v976 = vsel %vm449, %v975, 0.0
        %977 = vadd.xlane.f32.xlu0 %v976
        %v978 = vpop.xlane.xlu0 %977
        %v979 = vmul.f32 %v978, %v798
        %v980 = vsub.f32 %v970, %v974
        %v981 = vmul.f32 %v974, %v974
        %v982 = vsub.f32 %v979, %v981
        %v983 = vadd.f32 %v982, 1e-05
        %v984 = vrsqrt.pop %v983
        %v985 = vmul.f32 %v980, %v984
        %v986 = vlaneseq
        %v987 = vshrl.u32 %v986, 7
        %v988 = vsub.s32 4, %v987
        %v989 = vrot.slane %v424, %v988
        %v990 = vmul.f32 %v985, %v989
        %v991 = vlaneseq
        %v992 = vshrl.u32 %v991, 7
        %v993 = vsub.s32 5, %v992
        %v994 = vrot.slane %v424, %v993
        %v995 = vadd.f32 %v990, %v994
        %996 = vst.msk [vmem:[%s421] sm:$0xff] %vm449, %v995
        %s997 = sand.u32 %s215, 1
        %s998 = scalar_lea.sflag [#allocation7], %s997
        %s999 = sand.u32 %s215, 1
        %s1000 = smul.addr %s999, 8
        %s1001 = scalar_lea.vmem [#allocation19], %s1000
        // Predicated region
        $region85: #{tpu_custom_call.1} parent=51 // pred_check
          %p1002 = pneg %p225
        $region86: #{tpu_custom_call.1} parent=51 // pred_check_branch
          %1004 = sbr.rel (%p1002) target = $region88
        $region87: #{tpu_custom_call.1} parent=51 // pred_region
          %s1006 = ssub.s32 128, 128
          %1007 = vsyncadd %s998, %s1006
          %s1008 = smul.addr %s34, 128
          %s1009 = scalar_lea.hbm %s9, %s1008
          %s1011 = sshll.u32 %s1001, 4
          %s1012 = int_to_ptr.vmem [resolvable:$true] %s1011
          %1014 = dma.vmem_to_hbm [thread:$0]  %s1012, 128, %s1009, %s998
        $region88: #{tpu_custom_call.1} parent=51 // pred_fallthru
          _
      $region52: #{tpu_custom_call.1} parent=5 // pred_fallthru
        _
      %p1015 = scmp.le.s32.totalorder 2, %s29
      // Predicated region
      $region89: #{tpu_custom_call.1} parent=5 // pred_check
        %p1016 = pneg %p1015
      $region90: #{tpu_custom_call.1} parent=5 // pred_check_branch
        %1018 = sbr.rel (%p1016) target = $region92
      $region91: #{tpu_custom_call.1} parent=5 // pred_region
        %s1019 = ssub.s32 %s29, 2
        // Predicated region
        $region93: #{tpu_custom_call.1} parent=91 // pred_check
          %p1020 = pneg %p231
        $region94: #{tpu_custom_call.1} parent=91 // pred_check_branch
          %1022 = sbr.rel (%p1020) target = $region96
        $region95: #{tpu_custom_call.1} parent=91 // pred_region
          %s1023 = sand.u32 %s216, 1
          %s1024 = scalar_lea.sflag [#allocation7], %s1023
          %s1025 = sand.u32 %s216, 1
          %s1026 = smul.addr %s1025, 8
          %s1027 = scalar_lea.vmem [#allocation19], %s1026
          %1028 = dma.done %s1024, 128
        $region96: #{tpu_custom_call.1} parent=91 // pred_fallthru
          _
      $region92: #{tpu_custom_call.1} parent=5 // pred_fallthru
        _
    $region6: #{tpu_custom_call.1} parent=1 // loop_footer
      %s33 = sadd.s32 1, %s29
    $region7: #{tpu_custom_call.1} parent=1 // loop_footer_branch
      %28 = sbr.rel target = $region3
    $region8: #{tpu_custom_call.1} parent=1 // loop_exit
      _
    %1029 = vsyncpa [#allocation6], 1
    %s1030 = scalar_lea.sflag [#allocation6], 1
    %1031 = vsyncpa %s1030, 1
    %1032 = vsyncpa [#allocation9], 1
    %1033 = vsyncpa [#allocation12], 1
    %1034 = vsyncpa [#allocation15], 1
    %1035 = vsyncpa [#allocation18], 1
    %1036 = vsyncpa [#allocation7], 1
    %s1037 = scalar_lea.sflag [#allocation7], 1
    %1038 = vsyncpa %s1037, 1

</llo_original>
